<compile_context>
chip_gen: v7x
topology: tpu7x:2x2x1
jax: 0.10.0
libtpu: 0.0.40
codegen_flags: <defaults>
</compile_context>

<pallas_src>
import functools

import jax
import jax.numpy as jnp
from jax.experimental import pallas as pl
from jax.experimental.pallas import tpu as pltpu


def _leaky_relu(x, alpha):
    return jnp.where(x > 0, x, alpha * x)


def _elu(x):
    # F.elu(alpha=1.0); clamp the exp argument so the discarded positive branch
    # never produces inf.
    return jnp.where(x > 0, x, jnp.exp(jnp.minimum(x, 0.0)) - 1.0)


def _masked_softmax_matmul(e, adj_bias, vals):
    """softmax(e + adj_bias, axis=-1) @ vals, normalization folded post-matmul."""
    e = e + adj_bias                                       # additive mask (0 / -1e9)
    m = jnp.max(e, axis=-1, keepdims=True)
    p = jnp.exp(e - m)                                     # unnormalized probs
    s = jnp.sum(p, axis=-1, keepdims=True)
    acc = jnp.dot(p.astype(jnp.bfloat16), vals.astype(jnp.bfloat16),
                  preferred_element_type=jnp.float32)
    return acc * pl.reciprocal(s, approx=True)


def gat_fused_kernel(x_ref, adjb_ref, wall_ref, aall_ref, wout_ref, aout_ref,
                     gain_ref, bias_ref, out_ref, *,
                     alpha, eps, nheads, nhid, nclass):
    x = x_ref[...]                                         # (N, F)
    adjb = adjb_ref[...]                                   # (N, N) additive mask

    # ---- heads layer: fused lane-dense projection for all heads (MXU) ----
    wh_all = jnp.dot(x, wall_ref[...], preferred_element_type=jnp.float32)   # (N, nheads*nhid)
    f_all = jnp.dot(x, aall_ref[...], preferred_element_type=jnp.float32)    # (N, 2*nheads)

    head_outs = []
    for h in range(nheads):                                # static, unrolled
        f1 = f_all[:, h:h + 1]                             # (N, 1)
        f2 = f_all[:, nheads + h:nheads + h + 1]           # (N, 1)
        e = _leaky_relu(f1 + f2.T, alpha)                  # (N, N)
        wh_h = wh_all[:, h * nhid:(h + 1) * nhid]          # (N, nhid)
        hp = _masked_softmax_matmul(e, adjb, wh_h)         # (N, nhid)
        head_outs.append(_elu(hp))
    hcat = jnp.concatenate(head_outs, axis=-1)             # torch.cat(dim=1): (N, nheads*nhid)

    # ---- output attention layer (concat=False) + ELU ----
    wh_o = jnp.dot(hcat, wout_ref[...], preferred_element_type=jnp.float32)  # (N, C_pad)
    f_o = jnp.dot(hcat, aout_ref[...], preferred_element_type=jnp.float32)   # (N, 2)
    e_o = _leaky_relu(f_o[:, 0:1] + f_o[:, 1:2].T, alpha)
    hp_o = _masked_softmax_matmul(e_o, adjb, wh_o)         # (N, C_pad)
    h = _elu(hp_o)

    # ---- LayerNorm (biased var over the real nclass columns) + log_softmax ----
    n_rows, c_pad = h.shape
    col = jax.lax.broadcasted_iota(jnp.int32, (n_rows, c_pad), 1)
    valid = col < nclass
    inv_c = 1.0 / nclass
    mu = jnp.sum(jnp.where(valid, h, 0.0), axis=-1, keepdims=True) * inv_c
    var = jnp.sum(jnp.where(valid, (h - mu) ** 2, 0.0), axis=-1, keepdims=True) * inv_c
    normed = (h - mu) * jax.lax.rsqrt(var + eps)
    y = bias_ref[...] + normed * gain_ref[...]             # addcmul; padded gain/bias are 0
    ymax = jnp.max(jnp.where(valid, y, -1e30), axis=-1, keepdims=True)
    z = y - ymax
    lse = jnp.log(jnp.sum(jnp.where(valid, jnp.exp(z), 0.0), axis=-1, keepdims=True))
    out_ref[...] = jnp.where(valid, z - lse, 0.0)          # lane-dense (N, C_pad) store


def gat_forward(x, adj, params, *, alpha=0.2, eps=1e-5):
    # TODO(synk): dropout omitted — eval-mode semantics (training=False ⇒ identity).
    N, nfeat = x.shape
    W_h = params["W_heads"]                   # (nheads, nfeat, nhid)
    a1_h = params["a1_heads"][:, 0, :]        # (nheads, nhid)
    a2_h = params["a2_heads"][:, 0, :]
    nheads, _, nhid = W_h.shape
    W_o = params["W_out"]                     # (nheads*nhid, nclass)
    nclass = W_o.shape[1]
    c_pad = ((nclass + 127) // 128) * 128     # lane-dense padded class width

    # Fused projection weights: column block h == head h.
    W_all = jnp.transpose(W_h, (1, 0, 2)).reshape(nfeat, nheads * nhid)
    # Fold attention vectors into the projection: f1_h = x @ (W_h a1_h), etc.
    A_all = jnp.concatenate([
        jnp.einsum("hfd,hd->fh", W_h, a1_h),
        jnp.einsum("hfd,hd->fh", W_h, a2_h),
    ], axis=1)                                # (nfeat, 2*nheads)

    W_out_p = jnp.zeros((nheads * nhid, c_pad), jnp.float32).at[:, :nclass].set(W_o)
    A_out = jnp.concatenate([W_o @ params["a1_out"].T,
                             W_o @ params["a2_out"].T], axis=1)   # (nheads*nhid, 2)
    gain_p = jnp.zeros((1, c_pad), jnp.float32).at[:, :nclass].set(params["gain"])
    bias_p = jnp.zeros((1, c_pad), jnp.float32).at[:, :nclass].set(params["bias"])

    # Additive attention mask, built once in the wrapper.
    adj_bias = jnp.where(adj > 0, 0.0, -1e9).astype(jnp.float32)

    vmem = pl.BlockSpec(memory_space=pltpu.MemorySpace.VMEM)
    out = pl.pallas_call(
        functools.partial(gat_fused_kernel, alpha=alpha, eps=eps,
                          nheads=nheads, nhid=nhid, nclass=nclass),
        out_shape=jax.ShapeDtypeStruct((N, c_pad), jnp.float32),
        in_specs=[vmem] * 8,
        out_specs=vmem,
    )(x, adj_bias, W_all, A_all, W_out_p, A_out, gain_p, bias_p)
    return out[:, :nclass]


def init_params(key, nfeat, nhid, nclass, nheads):
    ks = jax.random.split(key, 6)
    scale = 0.3
    return {
        "W_heads": scale * jax.random.normal(ks[0], (nheads, nfeat, nhid), jnp.float32),
        "a1_heads": scale * jax.random.normal(ks[1], (nheads, 1, nhid), jnp.float32),
        "a2_heads": scale * jax.random.normal(ks[2], (nheads, 1, nhid), jnp.float32),
        "W_out": scale * jax.random.normal(ks[3], (nhid * nheads, nclass), jnp.float32),
        "a1_out": scale * jax.random.normal(ks[4], (1, nclass), jnp.float32),
        "a2_out": scale * jax.random.normal(ks[5], (1, nclass), jnp.float32),
        "gain": jnp.ones((1, nclass), jnp.float32),   # LayerNorm gain
        "bias": jnp.zeros((1, nclass), jnp.float32),  # LayerNorm bias
    }


if __name__ == "__main__":
    N, nfeat, nhid, nclass, nheads = 16, 16, 8, 4, 2
    alpha = 0.2

    key = jax.random.PRNGKey(0)
    k_x, k_adj, k_p = jax.random.split(key, 3)

    x = jax.random.normal(k_x, (N, nfeat), jnp.float32)
    adj = (jax.random.uniform(k_adj, (N, N)) > 0.5).astype(jnp.float32)
    adj = jnp.maximum(adj, jnp.eye(N, dtype=jnp.float32))   # self-loops

    params = init_params(k_p, nfeat, nhid, nclass, nheads)

    out = gat_forward(x, adj, params, alpha=alpha)
    out = jax.block_until_ready(out)

    assert out.shape == (N, nclass)
    assert bool(jnp.all(jnp.isfinite(out)))
    # log_softmax rows should sum to ~1 in prob space
    assert bool(jnp.all(jnp.abs(jnp.sum(jnp.exp(out), axis=-1) - 1.0) < 1e-2))
    print("KERNEL_OK")
</pallas_src>

<mosaic_0001>
module attributes {stable_mosaic.version = 11 : i64} {
  func.func @gat_fused_kernel(%arg0: memref<16x16xf32, #tpu.memory_space<vmem>>, %arg1: memref<16x16xf32, #tpu.memory_space<vmem>>, %arg2: memref<16x16xf32, #tpu.memory_space<vmem>>, %arg3: memref<16x4xf32, #tpu.memory_space<vmem>>, %arg4: memref<16x128xf32, #tpu.memory_space<vmem>>, %arg5: memref<16x2xf32, #tpu.memory_space<vmem>>, %arg6: memref<1x128xf32, #tpu.memory_space<vmem>>, %arg7: memref<1x128xf32, #tpu.memory_space<vmem>>, %arg8: memref<16x128xf32, #tpu.memory_space<vmem>>) attributes {dimension_semantics = [], scalar_prefetch = 0 : i64, scratch_operands = 0 : i64, tpu.core_type = #tpu.core_type<tc>} {
    %c0 = arith.constant 0 : index
    %c0_0 = arith.constant 0 : index
    %0 = vector.load %arg0[%c0, %c0_0] : memref<16x16xf32, #tpu.memory_space<vmem>>, vector<16x16xf32>
    %c0_1 = arith.constant 0 : index
    %c0_2 = arith.constant 0 : index
    %1 = vector.load %arg1[%c0_1, %c0_2] : memref<16x16xf32, #tpu.memory_space<vmem>>, vector<16x16xf32>
    %c0_3 = arith.constant 0 : index
    %c0_4 = arith.constant 0 : index
    %2 = vector.load %arg2[%c0_3, %c0_4] : memref<16x16xf32, #tpu.memory_space<vmem>>, vector<16x16xf32>
    %cst = arith.constant dense<0.000000e+00> : vector<16x16xf32>
    %3 = tpu.matmul %0, %2, %cst {dimension_numbers = #tpu.dot_dimension_numbers<[1], [0], [0], [1], [0, 0, 1, 1], [], []>} : vector<16x16xf32>, vector<16x16xf32>, vector<16x16xf32> -> vector<16x16xf32>
    %c0_5 = arith.constant 0 : index
    %c0_6 = arith.constant 0 : index
    %4 = vector.load %arg3[%c0_5, %c0_6] : memref<16x4xf32, #tpu.memory_space<vmem>>, vector<16x4xf32>
    %cst_7 = arith.constant dense<0.000000e+00> : vector<16x4xf32>
    %5 = tpu.matmul %0, %4, %cst_7 {dimension_numbers = #tpu.dot_dimension_numbers<[1], [0], [0], [1], [0, 0, 1, 1], [], []>} : vector<16x16xf32>, vector<16x4xf32>, vector<16x4xf32> -> vector<16x4xf32>
    %6 = vector.extract_strided_slice %5 {offsets = [0, 0], sizes = [16, 1], strides = [1, 1]} : vector<16x4xf32> to vector<16x1xf32>
    %7 = vector.extract_strided_slice %5 {offsets = [0, 2], sizes = [16, 1], strides = [1, 1]} : vector<16x4xf32> to vector<16x1xf32>
    %8 = tpu.transpose %7, [1, 0] : vector<16x1xf32> -> vector<1x16xf32>
    %9 = vector.broadcast %6 : vector<16x1xf32> to vector<16x16xf32>
    %10 = vector.broadcast %8 : vector<1x16xf32> to vector<16x16xf32>
    %11 = arith.addf %9, %10 : vector<16x16xf32>
    %cst_8 = arith.constant 0.000000e+00 : f32
    %12 = vector.broadcast %cst_8 : f32 to vector<16x16xf32>
    %13 = arith.cmpf ogt, %11, %12 : vector<16x16xf32>
    %cst_9 = arith.constant 2.000000e-01 : f32
    %14 = vector.broadcast %cst_9 : f32 to vector<16x16xf32>
    %15 = arith.mulf %14, %11 : vector<16x16xf32>
    %16 = arith.select %13, %11, %15 : vector<16x16xi1>, vector<16x16xf32>
    %17 = vector.extract_strided_slice %3 {offsets = [0, 0], sizes = [16, 8], strides = [1, 1]} : vector<16x16xf32> to vector<16x8xf32>
    %18 = arith.addf %16, %1 : vector<16x16xf32>
    %cst_10 = arith.constant dense<0xFF800000> : vector<16xf32>
    %19 = vector.multi_reduction <maximumf>, %18, %cst_10 [1] : vector<16x16xf32> to vector<16xf32>
    %20 = vector.shape_cast %19 : vector<16xf32> to vector<16x1xf32>
    %21 = vector.broadcast %20 : vector<16x1xf32> to vector<16x16xf32>
    %22 = arith.subf %18, %21 : vector<16x16xf32>
    %23 = math.exp %22 : vector<16x16xf32>
    %cst_11 = arith.constant dense<0.000000e+00> : vector<16xf32>
    %24 = vector.multi_reduction <add>, %23, %cst_11 [1] : vector<16x16xf32> to vector<16xf32>
    %25 = vector.shape_cast %24 : vector<16xf32> to vector<16x1xf32>
    %26 = arith.truncf %23 : vector<16x16xf32> to vector<16x16xbf16>
    %27 = arith.truncf %17 : vector<16x8xf32> to vector<16x8xbf16>
    %cst_12 = arith.constant dense<0.000000e+00> : vector<16x8xf32>
    %28 = tpu.matmul %26, %27, %cst_12 {dimension_numbers = #tpu.dot_dimension_numbers<[1], [0], [0], [1], [0, 0, 1, 1], [], []>} : vector<16x16xbf16>, vector<16x8xbf16>, vector<16x8xf32> -> vector<16x8xf32>
    %29 = tpu.reciprocal %25 {approx = true} : vector<16x1xf32> -> vector<16x1xf32>
    %30 = vector.broadcast %29 : vector<16x1xf32> to vector<16x8xf32>
    %31 = arith.mulf %28, %30 : vector<16x8xf32>
    %cst_13 = arith.constant 0.000000e+00 : f32
    %32 = vector.broadcast %cst_13 : f32 to vector<16x8xf32>
    %33 = arith.cmpf ogt, %31, %32 : vector<16x8xf32>
    %cst_14 = arith.constant 0.000000e+00 : f32
    %34 = vector.broadcast %cst_14 : f32 to vector<16x8xf32>
    %35 = arith.minimumf %31, %34 : vector<16x8xf32>
    %36 = math.exp %35 : vector<16x8xf32>
    %cst_15 = arith.constant 1.000000e+00 : f32
    %37 = vector.broadcast %cst_15 : f32 to vector<16x8xf32>
    %38 = arith.subf %36, %37 : vector<16x8xf32>
    %39 = arith.select %33, %31, %38 : vector<16x8xi1>, vector<16x8xf32>
    %40 = vector.extract_strided_slice %5 {offsets = [0, 1], sizes = [16, 1], strides = [1, 1]} : vector<16x4xf32> to vector<16x1xf32>
    %41 = vector.extract_strided_slice %5 {offsets = [0, 3], sizes = [16, 1], strides = [1, 1]} : vector<16x4xf32> to vector<16x1xf32>
    %42 = tpu.transpose %41, [1, 0] : vector<16x1xf32> -> vector<1x16xf32>
    %43 = vector.broadcast %40 : vector<16x1xf32> to vector<16x16xf32>
    %44 = vector.broadcast %42 : vector<1x16xf32> to vector<16x16xf32>
    %45 = arith.addf %43, %44 : vector<16x16xf32>
    %cst_16 = arith.constant 0.000000e+00 : f32
    %46 = vector.broadcast %cst_16 : f32 to vector<16x16xf32>
    %47 = arith.cmpf ogt, %45, %46 : vector<16x16xf32>
    %cst_17 = arith.constant 2.000000e-01 : f32
    %48 = vector.broadcast %cst_17 : f32 to vector<16x16xf32>
    %49 = arith.mulf %48, %45 : vector<16x16xf32>
    %50 = arith.select %47, %45, %49 : vector<16x16xi1>, vector<16x16xf32>
    %51 = vector.extract_strided_slice %3 {offsets = [0, 8], sizes = [16, 8], strides = [1, 1]} : vector<16x16xf32> to vector<16x8xf32>
    %52 = arith.addf %50, %1 : vector<16x16xf32>
    %cst_18 = arith.constant dense<0xFF800000> : vector<16xf32>
    %53 = vector.multi_reduction <maximumf>, %52, %cst_18 [1] : vector<16x16xf32> to vector<16xf32>
    %54 = vector.shape_cast %53 : vector<16xf32> to vector<16x1xf32>
    %55 = vector.broadcast %54 : vector<16x1xf32> to vector<16x16xf32>
    %56 = arith.subf %52, %55 : vector<16x16xf32>
    %57 = math.exp %56 : vector<16x16xf32>
    %cst_19 = arith.constant dense<0.000000e+00> : vector<16xf32>
    %58 = vector.multi_reduction <add>, %57, %cst_19 [1] : vector<16x16xf32> to vector<16xf32>
    %59 = vector.shape_cast %58 : vector<16xf32> to vector<16x1xf32>
    %60 = arith.truncf %57 : vector<16x16xf32> to vector<16x16xbf16>
    %61 = arith.truncf %51 : vector<16x8xf32> to vector<16x8xbf16>
    %cst_20 = arith.constant dense<0.000000e+00> : vector<16x8xf32>
    %62 = tpu.matmul %60, %61, %cst_20 {dimension_numbers = #tpu.dot_dimension_numbers<[1], [0], [0], [1], [0, 0, 1, 1], [], []>} : vector<16x16xbf16>, vector<16x8xbf16>, vector<16x8xf32> -> vector<16x8xf32>
    %63 = tpu.reciprocal %59 {approx = true} : vector<16x1xf32> -> vector<16x1xf32>
    %64 = vector.broadcast %63 : vector<16x1xf32> to vector<16x8xf32>
    %65 = arith.mulf %62, %64 : vector<16x8xf32>
    %cst_21 = arith.constant 0.000000e+00 : f32
    %66 = vector.broadcast %cst_21 : f32 to vector<16x8xf32>
    %67 = arith.cmpf ogt, %65, %66 : vector<16x8xf32>
    %cst_22 = arith.constant 0.000000e+00 : f32
    %68 = vector.broadcast %cst_22 : f32 to vector<16x8xf32>
    %69 = arith.minimumf %65, %68 : vector<16x8xf32>
    %70 = math.exp %69 : vector<16x8xf32>
    %cst_23 = arith.constant 1.000000e+00 : f32
    %71 = vector.broadcast %cst_23 : f32 to vector<16x8xf32>
    %72 = arith.subf %70, %71 : vector<16x8xf32>
    %73 = arith.select %67, %65, %72 : vector<16x8xi1>, vector<16x8xf32>
    %74 = tpu.concatenate %39, %73 in 1 : vector<16x8xf32>, vector<16x8xf32> -> vector<16x16xf32>
    %c0_24 = arith.constant 0 : index
    %c0_25 = arith.constant 0 : index
    %75 = vector.load %arg4[%c0_24, %c0_25] : memref<16x128xf32, #tpu.memory_space<vmem>>, vector<16x128xf32>
    %cst_26 = arith.constant dense<0.000000e+00> : vector<16x128xf32>
    %76 = tpu.matmul %74, %75, %cst_26 {dimension_numbers = #tpu.dot_dimension_numbers<[1], [0], [0], [1], [0, 0, 1, 1], [], []>} : vector<16x16xf32>, vector<16x128xf32>, vector<16x128xf32> -> vector<16x128xf32>
    %c0_27 = arith.constant 0 : index
    %c0_28 = arith.constant 0 : index
    %77 = vector.load %arg5[%c0_27, %c0_28] : memref<16x2xf32, #tpu.memory_space<vmem>>, vector<16x2xf32>
    %cst_29 = arith.constant dense<0.000000e+00> : vector<16x2xf32>
    %78 = tpu.matmul %74, %77, %cst_29 {dimension_numbers = #tpu.dot_dimension_numbers<[1], [0], [0], [1], [0, 0, 1, 1], [], []>} : vector<16x16xf32>, vector<16x2xf32>, vector<16x2xf32> -> vector<16x2xf32>
    %79 = vector.extract_strided_slice %78 {offsets = [0, 0], sizes = [16, 1], strides = [1, 1]} : vector<16x2xf32> to vector<16x1xf32>
    %80 = vector.extract_strided_slice %78 {offsets = [0, 1], sizes = [16, 1], strides = [1, 1]} : vector<16x2xf32> to vector<16x1xf32>
    %81 = tpu.transpose %80, [1, 0] : vector<16x1xf32> -> vector<1x16xf32>
    %82 = vector.broadcast %79 : vector<16x1xf32> to vector<16x16xf32>
    %83 = vector.broadcast %81 : vector<1x16xf32> to vector<16x16xf32>
    %84 = arith.addf %82, %83 : vector<16x16xf32>
    %cst_30 = arith.constant 0.000000e+00 : f32
    %85 = vector.broadcast %cst_30 : f32 to vector<16x16xf32>
    %86 = arith.cmpf ogt, %84, %85 : vector<16x16xf32>
    %cst_31 = arith.constant 2.000000e-01 : f32
    %87 = vector.broadcast %cst_31 : f32 to vector<16x16xf32>
    %88 = arith.mulf %87, %84 : vector<16x16xf32>
    %89 = arith.select %86, %84, %88 : vector<16x16xi1>, vector<16x16xf32>
    %90 = arith.addf %89, %1 : vector<16x16xf32>
    %cst_32 = arith.constant dense<0xFF800000> : vector<16xf32>
    %91 = vector.multi_reduction <maximumf>, %90, %cst_32 [1] : vector<16x16xf32> to vector<16xf32>
    %92 = vector.shape_cast %91 : vector<16xf32> to vector<16x1xf32>
    %93 = vector.broadcast %92 : vector<16x1xf32> to vector<16x16xf32>
    %94 = arith.subf %90, %93 : vector<16x16xf32>
    %95 = math.exp %94 : vector<16x16xf32>
    %cst_33 = arith.constant dense<0.000000e+00> : vector<16xf32>
    %96 = vector.multi_reduction <add>, %95, %cst_33 [1] : vector<16x16xf32> to vector<16xf32>
    %97 = vector.shape_cast %96 : vector<16xf32> to vector<16x1xf32>
    %98 = arith.truncf %95 : vector<16x16xf32> to vector<16x16xbf16>
    %99 = arith.truncf %76 : vector<16x128xf32> to vector<16x128xbf16>
    %cst_34 = arith.constant dense<0.000000e+00> : vector<16x128xf32>
    %100 = tpu.matmul %98, %99, %cst_34 {dimension_numbers = #tpu.dot_dimension_numbers<[1], [0], [0], [1], [0, 0, 1, 1], [], []>} : vector<16x16xbf16>, vector<16x128xbf16>, vector<16x128xf32> -> vector<16x128xf32>
    %101 = tpu.reciprocal %97 {approx = true} : vector<16x1xf32> -> vector<16x1xf32>
    %102 = vector.broadcast %101 : vector<16x1xf32> to vector<16x128xf32>
    %103 = arith.mulf %100, %102 : vector<16x128xf32>
    %cst_35 = arith.constant 0.000000e+00 : f32
    %104 = vector.broadcast %cst_35 : f32 to vector<16x128xf32>
    %105 = arith.cmpf ogt, %103, %104 : vector<16x128xf32>
    %cst_36 = arith.constant 0.000000e+00 : f32
    %106 = vector.broadcast %cst_36 : f32 to vector<16x128xf32>
    %107 = arith.minimumf %103, %106 : vector<16x128xf32>
    %108 = math.exp %107 : vector<16x128xf32>
    %cst_37 = arith.constant 1.000000e+00 : f32
    %109 = vector.broadcast %cst_37 : f32 to vector<16x128xf32>
    %110 = arith.subf %108, %109 : vector<16x128xf32>
    %111 = arith.select %105, %103, %110 : vector<16x128xi1>, vector<16x128xf32>
    %112 = tpu.iota {dimensions = array<i32: 1>} : vector<16x128xi32>
    %c4_i32 = arith.constant 4 : i32
    %113 = vector.broadcast %c4_i32 : i32 to vector<16x128xi32>
    %114 = arith.cmpi slt, %112, %113 : vector<16x128xi32>
    %cst_38 = arith.constant 0.000000e+00 : f32
    %115 = vector.broadcast %cst_38 : f32 to vector<16x128xf32>
    %116 = arith.select %114, %111, %115 : vector<16x128xi1>, vector<16x128xf32>
    %cst_39 = arith.constant dense<0.000000e+00> : vector<16xf32>
    %117 = vector.multi_reduction <add>, %116, %cst_39 [1] : vector<16x128xf32> to vector<16xf32>
    %118 = vector.shape_cast %117 : vector<16xf32> to vector<16x1xf32>
    %cst_40 = arith.constant 2.500000e-01 : f32
    %119 = vector.broadcast %cst_40 : f32 to vector<16x1xf32>
    %120 = arith.mulf %118, %119 : vector<16x1xf32>
    %121 = vector.broadcast %120 : vector<16x1xf32> to vector<16x128xf32>
    %122 = arith.subf %111, %121 : vector<16x128xf32>
    %123 = arith.mulf %122, %122 : vector<16x128xf32>
    %cst_41 = arith.constant 0.000000e+00 : f32
    %124 = vector.broadcast %cst_41 : f32 to vector<16x128xf32>
    %125 = arith.select %114, %123, %124 : vector<16x128xi1>, vector<16x128xf32>
    %cst_42 = arith.constant dense<0.000000e+00> : vector<16xf32>
    %126 = vector.multi_reduction <add>, %125, %cst_42 [1] : vector<16x128xf32> to vector<16xf32>
    %127 = vector.shape_cast %126 : vector<16xf32> to vector<16x1xf32>
    %cst_43 = arith.constant 2.500000e-01 : f32
    %128 = vector.broadcast %cst_43 : f32 to vector<16x1xf32>
    %129 = arith.mulf %127, %128 : vector<16x1xf32>
    %130 = vector.broadcast %120 : vector<16x1xf32> to vector<16x128xf32>
    %131 = arith.subf %111, %130 : vector<16x128xf32>
    %cst_44 = arith.constant 9.99999974E-6 : f32
    %132 = vector.broadcast %cst_44 : f32 to vector<16x1xf32>
    %133 = arith.addf %129, %132 : vector<16x1xf32>
    %134 = math.rsqrt %133 : vector<16x1xf32>
    %135 = vector.broadcast %134 : vector<16x1xf32> to vector<16x128xf32>
    %136 = arith.mulf %131, %135 : vector<16x128xf32>
    %c0_45 = arith.constant 0 : index
    %c0_46 = arith.constant 0 : index
    %137 = vector.load %arg7[%c0_45, %c0_46] : memref<1x128xf32, #tpu.memory_space<vmem>>, vector<1x128xf32>
    %c0_47 = arith.constant 0 : index
    %c0_48 = arith.constant 0 : index
    %138 = vector.load %arg6[%c0_47, %c0_48] : memref<1x128xf32, #tpu.memory_space<vmem>>, vector<1x128xf32>
    %139 = vector.broadcast %138 : vector<1x128xf32> to vector<16x128xf32>
    %140 = arith.mulf %136, %139 : vector<16x128xf32>
    %141 = vector.broadcast %137 : vector<1x128xf32> to vector<16x128xf32>
    %142 = arith.addf %141, %140 : vector<16x128xf32>
    %cst_49 = arith.constant -1.000000e+30 : f32
    %143 = vector.broadcast %cst_49 : f32 to vector<16x128xf32>
    %144 = arith.select %114, %142, %143 : vector<16x128xi1>, vector<16x128xf32>
    %cst_50 = arith.constant dense<0xFF800000> : vector<16xf32>
    %145 = vector.multi_reduction <maximumf>, %144, %cst_50 [1] : vector<16x128xf32> to vector<16xf32>
    %146 = vector.shape_cast %145 : vector<16xf32> to vector<16x1xf32>
    %147 = vector.broadcast %146 : vector<16x1xf32> to vector<16x128xf32>
    %148 = arith.subf %142, %147 : vector<16x128xf32>
    %149 = math.exp %148 : vector<16x128xf32>
    %cst_51 = arith.constant 0.000000e+00 : f32
    %150 = vector.broadcast %cst_51 : f32 to vector<16x128xf32>
    %151 = arith.select %114, %149, %150 : vector<16x128xi1>, vector<16x128xf32>
    %cst_52 = arith.constant dense<0.000000e+00> : vector<16xf32>
    %152 = vector.multi_reduction <add>, %151, %cst_52 [1] : vector<16x128xf32> to vector<16xf32>
    %153 = vector.shape_cast %152 : vector<16xf32> to vector<16x1xf32>
    %154 = math.log %153 : vector<16x1xf32>
    %155 = vector.broadcast %154 : vector<16x1xf32> to vector<16x128xf32>
    %156 = arith.subf %148, %155 : vector<16x128xf32>
    %cst_53 = arith.constant 0.000000e+00 : f32
    %157 = vector.broadcast %cst_53 : f32 to vector<16x128xf32>
    %158 = arith.select %114, %156, %157 : vector<16x128xi1>, vector<16x128xf32>
    %c0_54 = arith.constant 0 : index
    %c0_55 = arith.constant 0 : index
    %159 = vector.load %arg8[%c0_54, %c0_55] : memref<16x128xf32, #tpu.memory_space<vmem>>, vector<16x128xf32>
    tpu.vector_store %arg8[%c0_54, %c0_55], %158 {strides = array<i32>} : memref<16x128xf32, #tpu.memory_space<vmem>>, vector<16x128xf32>,
    return
  }
}

</mosaic_0001>

<llo_original>
// kernel: tpu_custom_call.1
$region0: #{tpu_custom_call.1}
  #allocation0 [shape = 'u32[]', space=smem, size = 0x4, offset = 0x4, fixed_abs, tag = 'smem constant byte address 0x4 - core index']
  #allocation1 [shape = 'u32[144,128]{1,0:T(1,128)}', space=vmem, size = 0x12000, scoped, tag = 'internal scratch']
  %s0 = inlined_call_operand.vmem [shape: f32[16,16], index: 0, kind: input, shape index: {}]
  %s1 = inlined_call_operand.vmem [shape: f32[16,16], index: 1, kind: input, shape index: {}]
  %s2 = inlined_call_operand.hbm [shape: f32[16,16], index: 2, kind: input, shape index: {}]
  %s3 = inlined_call_operand.vmem [shape: f32[16,4], index: 3, kind: input, shape index: {}]
  %s4 = inlined_call_operand.vmem [shape: f32[16,128], index: 4, kind: input, shape index: {}]
  %s5 = inlined_call_operand.vmem [shape: f32[16,2], index: 5, kind: input, shape index: {}]
  %s6 = inlined_call_operand.vmem [shape: f32[1,128], index: 6, kind: input, shape index: {}]
  %s7 = inlined_call_operand.vmem [shape: f32[1,128], index: 7, kind: input, shape index: {}]
  %s8 = inlined_call_operand.hbm [shape: f32[16,128], index: 8, kind: output, shape index: {}]
  %s9 = sld [smem:[#allocation0]]
  $region46: #{tpu_custom_call.1} parent=0
    _
  %s11 = ssub.s32 1, %s9
  %s12 = scalar_select 0, %s11, %s9
  $region1: #{tpu_custom_call.1} parent=0
    #allocation2 [shape = 'u8[8192]{0}', space=vmem, size = 0x2000, scoped, tag = 'input window, operand 2, single buffered']
    #allocation3 [shape = 's32[1]{0}', space=sflag, size = 0x4, scoped, tag = 'scoped memory for tpu_custom_call.1']
    #allocation4 [shape = 's32[1]{0}', space=sflag, size = 0x4, scoped, tag = 'scoped memory for tpu_custom_call.1']
    #allocation5 [shape = 'u8[8192]{0}', space=vmem, size = 0x2000, scoped, tag = 'output window, operand 0, single buffered']
    %13 = vsyncpa [#allocation3], 0
    %14 = vsyncpa [#allocation4], 0
    // Predicated region
    $region2: #{tpu_custom_call.1} parent=1 // pred_check
      _
    $region3: #{tpu_custom_call.1} parent=1 // pred_check_branch
      %16 = sbr.rel (0) target = $region5
    $region4: #{tpu_custom_call.1} parent=1 // pred_region
      _
    $region5: #{tpu_custom_call.1} parent=1 // pred_fallthru
      _
    // Predicated region
    $region6: #{tpu_custom_call.1} parent=1 // pred_check
      _
    $region7: #{tpu_custom_call.1} parent=1 // pred_check_branch
      %18 = sbr.rel (0) target = $region9
    $region8: #{tpu_custom_call.1} parent=1 // pred_region
      _
    $region9: #{tpu_custom_call.1} parent=1 // pred_fallthru
      _
    // Predicated region
    $region10: #{tpu_custom_call.1} parent=1 // pred_check
      _
    $region11: #{tpu_custom_call.1} parent=1 // pred_check_branch
      %20 = sbr.rel (0) target = $region13
    $region12: #{tpu_custom_call.1} parent=1 // pred_region
      %s22 = ssub.s32 256, 256
      %23 = vsyncadd [#allocation3], %s22
      %s24 = sshll.u32 [#allocation2], 4
      %s25 = int_to_ptr.vmem [resolvable:$true] %s24
      %30 = dma.hbm_to_vmem [thread:$0]  %s2, 256, %s25, [#allocation3], 128, 128, 8
    $region13: #{tpu_custom_call.1} parent=1 // pred_fallthru
      _
    // Predicated region
    $region14: #{tpu_custom_call.1} parent=1 // pred_check
      _
    $region15: #{tpu_custom_call.1} parent=1 // pred_check_branch
      %32 = sbr.rel (0) target = $region17
    $region16: #{tpu_custom_call.1} parent=1 // pred_region
      _
    $region17: #{tpu_custom_call.1} parent=1 // pred_fallthru
      _
    // Predicated region
    $region18: #{tpu_custom_call.1} parent=1 // pred_check
      _
    $region19: #{tpu_custom_call.1} parent=1 // pred_check_branch
      %34 = sbr.rel (0) target = $region21
    $region20: #{tpu_custom_call.1} parent=1 // pred_region
      _
    $region21: #{tpu_custom_call.1} parent=1 // pred_fallthru
      _
    // Predicated region
    $region22: #{tpu_custom_call.1} parent=1 // pred_check
      _
    $region23: #{tpu_custom_call.1} parent=1 // pred_check_branch
      %36 = sbr.rel (0) target = $region25
    $region24: #{tpu_custom_call.1} parent=1 // pred_region
      _
    $region25: #{tpu_custom_call.1} parent=1 // pred_fallthru
      _
    // Predicated region
    $region26: #{tpu_custom_call.1} parent=1 // pred_check
      _
    $region27: #{tpu_custom_call.1} parent=1 // pred_check_branch
      %38 = sbr.rel (0) target = $region29
    $region28: #{tpu_custom_call.1} parent=1 // pred_region
      _
    $region29: #{tpu_custom_call.1} parent=1 // pred_fallthru
      _
    // Predicated region
    $region30: #{tpu_custom_call.1} parent=1 // pred_check
      _
    $region31: #{tpu_custom_call.1} parent=1 // pred_check_branch
      %40 = sbr.rel (0) target = $region33
    $region32: #{tpu_custom_call.1} parent=1 // pred_region
      _
    $region33: #{tpu_custom_call.1} parent=1 // pred_fallthru
      _
    // Predicated region
    $region34: #{tpu_custom_call.1} parent=1 // pred_check
      _
    $region35: #{tpu_custom_call.1} parent=1 // pred_check_branch
      %42 = sbr.rel (0) target = $region37
    $region36: #{tpu_custom_call.1} parent=1 // pred_region
      %43 = dma.done [#allocation3], 256
    $region37: #{tpu_custom_call.1} parent=1 // pred_fallthru
      _
    %v45 = vld [vmem:[%s0] sm:$0xff]
    %v46 = vld [vmem:[%s0 + $0x8] sm:$0xff]
    %v47 = vld [vmem:[%s1] sm:$0xff]
    %v48 = vld [vmem:[%s1 + $0x8] sm:$0xff]
    %v49 = vld [vmem:[#allocation2] sm:$0xff]
    %v50 = vld [vmem:[#allocation2 + $0x8] sm:$0xff]
    %vm51 = vcmask 130048
    %v53 = vsel %vm51, %v45, 0
    %v56 = vsel %vm51, %v46, 0
    %58 = vmatprep.subr.mxu0 0.0
    %59 = vmatpush1.msra.mxu0 %v49
    %60 = vmatprep.subr.mxu0 0.0
    %61 = vmatpush1.msra.mxu0 %v50
    %62 = vmatprep.subr.mxu0 0.0
    %63 = vmatpush1.msra.mxu0 0.0
    %64 = vmatprep.subr.mxu0 0.0
    %65 = vmatpush1.msra.mxu0 0.0
    %66 = vmatprep.subr.mxu0 0.0
    %67 = vmatpush1.msra.mxu0 0.0
    %68 = vmatprep.subr.mxu0 0.0
    %69 = vmatpush1.msra.mxu0 0.0
    %70 = vmatprep.subr.mxu0 0.0
    %71 = vmatpush1.msra.mxu0 0.0
    %72 = vmatprep.subr.mxu0 0.0
    %73 = vmatpush1.msra.mxu0 0.0
    %74 = vmatprep.subr.mxu0 0.0
    %75 = vmatpush1.msra.mxu0 0.0
    %76 = vmatprep.subr.mxu0 0.0
    %77 = vmatpush1.msra.mxu0 0.0
    %78 = vmatprep.subr.mxu0 0.0
    %79 = vmatpush1.msra.mxu0 0.0
    %80 = vmatprep.subr.mxu0 0.0
    %81 = vmatpush1.msra.mxu0 0.0
    %82 = vmatprep.subr.mxu0 0.0
    %83 = vmatpush1.msra.mxu0 0.0
    %84 = vmatprep.subr.mxu0 0.0
    %85 = vmatpush1.msra.mxu0 0.0
    %86 = vmatprep.subr.mxu0 0.0
    %87 = vmatpush1.msra.mxu0 0.0
    %88 = vmatprep.subr.mxu0 0.0
    %89 = vmatpush1.msra.mxu0 0.0
    %90 = vmatprep.subr.mxu0 0.0
    %91 = vmatpush1.msra.mxu0 0.0
    %92 = vmatprep.subr.mxu0 0.0
    %93 = vmatpush1.msra.mxu0 0.0
    %94 = vmatprep.subr.mxu0 0.0
    %95 = vmatpush1.msra.mxu0 0.0
    %96 = vmatprep.subr.mxu0 0.0
    %97 = vmatpush1.msra.mxu0 0.0
    %98 = vmatprep.subr.mxu0 0.0
    %99 = vmatpush1.msra.mxu0 0.0
    %100 = vmatprep.subr.mxu0 0.0
    %101 = vmatpush1.msra.mxu0 0.0
    %102 = vmatprep.subr.mxu0 0.0
    %103 = vmatpush1.msra.mxu0 0.0
    %104 = vmatprep.subr.mxu0 0.0
    %105 = vmatpush1.msra.mxu0 0.0
    %106 = vmatprep.subr.mxu0 0.0
    %107 = vmatpush1.msra.mxu0 0.0
    %108 = vmatprep.subr.mxu0 0.0
    %109 = vmatpush1.msra.mxu0 0.0
    %110 = vmatprep.subr.mxu0 0.0
    %111 = vmatpush1.msra.mxu0 0.0
    %112 = vmatprep.subr.mxu0 0.0
    %113 = vmatpush1.msra.mxu0 0.0
    %114 = vmatprep.subr.mxu0 0.0
    %115 = vmatpush1.msra.mxu0 0.0
    %116 = vmatprep.subr.mxu0 0.0
    %117 = vmatpush1.msra.mxu0 0.0
    %118 = vmatprep.subr.mxu0 0.0
    %119 = vmatpush1.msra.mxu0 0.0
    %120 = vmatprep.subr.mxu0 0.0
    %121 = vmatpush1.msra.mxu0 0.0
    %122 = vmatprep.mubr.f32.mxu0 0.0
    %123 = vmatmul.mubr.f32.gmra.mrb[0].mxu0 %v53
    %v124 = vpop.f32.mrb[0].mxu0
    %v125 = vadd.f32 0.0, %v124
    %v126 = vpop.f32.mrb[0].mxu0
    %127 = vmatprep.mubr.f32.mxu0 0.0
    %128 = vmatmul.mubr.f32.gmra.mrb[0].mxu0 %v56
    %v129 = vpop.f32.mrb[0].mxu0
    %v130 = vadd.f32 0.0, %v129
    %v131 = vpop.f32.mrb[0].mxu0
    %132 = vdwg.mxu0
    %v133 = vld [vmem:[%s3] sm:$0xff]
    %v134 = vld [vmem:[%s3 + $0x8] sm:$0xff]
    %135 = vmatprep.subr.mxu0 0.0
    %136 = vmatpush1.msra.mxu0 %v133
    %137 = vmatprep.subr.mxu0 0.0
    %138 = vmatpush1.msra.mxu0 %v134
    %139 = vmatprep.subr.mxu0 0.0
    %140 = vmatpush1.msra.mxu0 0.0
    %141 = vmatprep.subr.mxu0 0.0
    %142 = vmatpush1.msra.mxu0 0.0
    %143 = vmatprep.subr.mxu0 0.0
    %144 = vmatpush1.msra.mxu0 0.0
    %145 = vmatprep.subr.mxu0 0.0
    %146 = vmatpush1.msra.mxu0 0.0
    %147 = vmatprep.subr.mxu0 0.0
    %148 = vmatpush1.msra.mxu0 0.0
    %149 = vmatprep.subr.mxu0 0.0
    %150 = vmatpush1.msra.mxu0 0.0
    %151 = vmatprep.subr.mxu0 0.0
    %152 = vmatpush1.msra.mxu0 0.0
    %153 = vmatprep.subr.mxu0 0.0
    %154 = vmatpush1.msra.mxu0 0.0
    %155 = vmatprep.subr.mxu0 0.0
    %156 = vmatpush1.msra.mxu0 0.0
    %157 = vmatprep.subr.mxu0 0.0
    %158 = vmatpush1.msra.mxu0 0.0
    %159 = vmatprep.subr.mxu0 0.0
    %160 = vmatpush1.msra.mxu0 0.0
    %161 = vmatprep.subr.mxu0 0.0
    %162 = vmatpush1.msra.mxu0 0.0
    %163 = vmatprep.subr.mxu0 0.0
    %164 = vmatpush1.msra.mxu0 0.0
    %165 = vmatprep.subr.mxu0 0.0
    %166 = vmatpush1.msra.mxu0 0.0
    %167 = vmatprep.subr.mxu0 0.0
    %168 = vmatpush1.msra.mxu0 0.0
    %169 = vmatprep.subr.mxu0 0.0
    %170 = vmatpush1.msra.mxu0 0.0
    %171 = vmatprep.subr.mxu0 0.0
    %172 = vmatpush1.msra.mxu0 0.0
    %173 = vmatprep.subr.mxu0 0.0
    %174 = vmatpush1.msra.mxu0 0.0
    %175 = vmatprep.subr.mxu0 0.0
    %176 = vmatpush1.msra.mxu0 0.0
    %177 = vmatprep.subr.mxu0 0.0
    %178 = vmatpush1.msra.mxu0 0.0
    %179 = vmatprep.subr.mxu0 0.0
    %180 = vmatpush1.msra.mxu0 0.0
    %181 = vmatprep.subr.mxu0 0.0
    %182 = vmatpush1.msra.mxu0 0.0
    %183 = vmatprep.subr.mxu0 0.0
    %184 = vmatpush1.msra.mxu0 0.0
    %185 = vmatprep.subr.mxu0 0.0
    %186 = vmatpush1.msra.mxu0 0.0
    %187 = vmatprep.subr.mxu0 0.0
    %188 = vmatpush1.msra.mxu0 0.0
    %189 = vmatprep.subr.mxu0 0.0
    %190 = vmatpush1.msra.mxu0 0.0
    %191 = vmatprep.subr.mxu0 0.0
    %192 = vmatpush1.msra.mxu0 0.0
    %193 = vmatprep.subr.mxu0 0.0
    %194 = vmatpush1.msra.mxu0 0.0
    %195 = vmatprep.subr.mxu0 0.0
    %196 = vmatpush1.msra.mxu0 0.0
    %197 = vmatprep.subr.mxu0 0.0
    %198 = vmatpush1.msra.mxu0 0.0
    %199 = vmatprep.mubr.f32.mxu0 0.0
    %200 = vmatmul.mubr.f32.gmra.mrb[0].mxu0 %v53
    %v201 = vpop.f32.mrb[0].mxu0
    %v202 = vadd.f32 0.0, %v201
    %v203 = vpop.f32.mrb[0].mxu0
    %204 = vmatprep.mubr.f32.mxu0 0.0
    %205 = vmatmul.mubr.f32.gmra.mrb[0].mxu0 %v56
    %v206 = vpop.f32.mrb[0].mxu0
    %v207 = vadd.f32 0.0, %v206
    %v208 = vpop.f32.mrb[0].mxu0
    %209 = vdwg.mxu0
    %212 = vrot.lane.b32.xlu0 %v202, 126
    %v213 = vpop.permute.xlu0 %212
    %214 = vrot.lane.b32.xlu0 %v207, 126
    %v215 = vpop.permute.xlu0 %214
    %218 = vxpose.xlu0.b32.start [1/16] %v213, 128
    %219 = vxpose.xlu0.b32.cont [2/16] %v215, 128
    %220 = vxpose.xlu0.b32.cont [3/16] 0.0, 128
    %221 = vxpose.xlu0.b32.cont [4/16] 0.0, 128
    %222 = vxpose.xlu0.b32.cont [5/16] 0.0, 128
    %223 = vxpose.xlu0.b32.cont [6/16] 0.0, 128
    %224 = vxpose.xlu0.b32.cont [7/16] 0.0, 128
    %225 = vxpose.xlu0.b32.cont [8/16] 0.0, 128
    %226 = vxpose.xlu0.b32.cont [9/16] 0.0, 128
    %227 = vxpose.xlu0.b32.cont [10/16] 0.0, 128
    %228 = vxpose.xlu0.b32.cont [11/16] 0.0, 128
    %229 = vxpose.xlu0.b32.cont [12/16] 0.0, 128
    %230 = vxpose.xlu0.b32.cont [13/16] 0.0, 128
    %231 = vxpose.xlu0.b32.cont [14/16] 0.0, 128
    %232 = vxpose.xlu0.b32.cont [15/16] 0.0, 128
    %233 = vxpose.xlu0.b32.end [16/16] 0.0, 128
    %v234 = vpop.trf.xlu0
    %v235 = vpop.trf.xlu0
    %v236 = vpop.trf.xlu0
    %v237 = vpop.trf.xlu0
    %v238 = vpop.trf.xlu0
    %v239 = vpop.trf.xlu0
    %v240 = vpop.trf.xlu0
    %v241 = vpop.trf.xlu0
    %v242 = vpop.trf.xlu0
    %v243 = vpop.trf.xlu0
    %v244 = vpop.trf.xlu0
    %v245 = vpop.trf.xlu0
    %v246 = vpop.trf.xlu0
    %v247 = vpop.trf.xlu0
    %v248 = vpop.trf.xlu0
    %v249 = vpop.trf.xlu0
    %250 = vset.pattern.permute.xlu0 0
    %251 = vperm.xlu0 %250, %v202
    %v252 = vpop.permute.xlu0 %251
    %254 = vset.pattern.permute.xlu0 0
    %255 = vperm.xlu0 %254, %v207
    %v256 = vpop.permute.xlu0 %255
    %v258 = vlaneseq
    %v259 = vshrl.u32 %v258, 7
    %v260 = vsub.s32 0, %v259
    %v261 = vrot.slane %v234, %v260
    %v262 = vadd.f32 %v252, %v261
    %v263 = vadd.f32 %v256, %v261
    %vm264 = vcmp.gt.f32.partialorder %v262, 0.0
    %vm265 = vcmp.gt.f32.partialorder %v263, 0.0
    %v266 = vmul.f32 %v262, 0.2
    %v267 = vmul.f32 %v263, 0.2
    %v268 = vsel %vm264, %v262, %v266
    %v269 = vsel %vm265, %v263, %v267
    %v270 = vadd.f32 %v268, %v47
    %v271 = vadd.f32 %v269, %v48
    %v272 = vsel %vm51, %v270, -inf
    %273 = vmax.xlane.f32.xlu0 %v272
    %v274 = vpop.xlane.xlu0 %273
    %v275 = vsel %vm51, %v271, -inf
    %276 = vmax.xlane.f32.xlu0 %v275
    %v277 = vpop.xlane.xlu0 %276
    %v278 = vsub.f32 %v270, %v274
    %v279 = vsub.f32 %v271, %v277
    %v280 = vmul.f32 %v278, 1.442695
    %v281 = vpow.pop %v280
    %v282 = vmul.f32 %v279, 1.442695
    %v283 = vpow.pop %v282
    %v284 = vsel %vm51, %v281, 0.0
    %285 = vadd.xlane.f32.xlu0 %v284
    %v286 = vpop.xlane.xlu0 %285
    %v287 = vsel %vm51, %v283, 0.0
    %288 = vadd.xlane.f32.xlu0 %v287
    %v289 = vpop.xlane.xlu0 %288
    %v290 = vpack.c.bf16 %v283, %v281
    %v291 = vpack.c.bf16 %v130, %v125
    %v293 = vsel %vm51, %v290, 0
    %295 = vmatprep.subr.bf16.mxu0 0
    %296 = vmatpush1.bf16.msra.mxu0 %v291
    %297 = vmatprep.subr.bf16.mxu0 0
    %298 = vmatpush1.bf16.msra.mxu0 0
    %299 = vmatprep.subr.bf16.mxu0 0
    %300 = vmatpush1.bf16.msra.mxu0 0
    %301 = vmatprep.subr.bf16.mxu0 0
    %302 = vmatpush1.bf16.msra.mxu0 0
    %303 = vmatprep.subr.bf16.mxu0 0
    %304 = vmatpush1.bf16.msra.mxu0 0
    %305 = vmatprep.subr.bf16.mxu0 0
    %306 = vmatpush1.bf16.msra.mxu0 0
    %307 = vmatprep.subr.bf16.mxu0 0
    %308 = vmatpush1.bf16.msra.mxu0 0
    %309 = vmatprep.subr.bf16.mxu0 0
    %310 = vmatpush1.bf16.msra.mxu0 0
    %311 = vmatprep.subr.bf16.mxu0 0
    %312 = vmatpush1.bf16.msra.mxu0 0
    %313 = vmatprep.subr.bf16.mxu0 0
    %314 = vmatpush1.bf16.msra.mxu0 0
    %315 = vmatprep.subr.bf16.mxu0 0
    %316 = vmatpush1.bf16.msra.mxu0 0
    %317 = vmatprep.subr.bf16.mxu0 0
    %318 = vmatpush1.bf16.msra.mxu0 0
    %319 = vmatprep.subr.bf16.mxu0 0
    %320 = vmatpush1.bf16.msra.mxu0 0
    %321 = vmatprep.subr.bf16.mxu0 0
    %322 = vmatpush1.bf16.msra.mxu0 0
    %323 = vmatprep.subr.bf16.mxu0 0
    %324 = vmatpush1.bf16.msra.mxu0 0
    %325 = vmatprep.subr.bf16.mxu0 0
    %326 = vmatpush1.bf16.msra.mxu0 0
    %327 = vmatprep.mubr.bf16.mxu0 0
    %328 = vmatmul.mubr.bf16.gmra.mrb[0].mxu0 %v293
    %v329 = vpop.f32.mrb[0].mxu0
    %v330 = vadd.f32 0.0, %v329
    %v331 = vpop.f32.mrb[0].mxu0
    %v332 = vpop.f32.mrb[0].mxu0
    %v333 = vadd.f32 0.0, %v332
    %v334 = vpop.f32.mrb[0].mxu0
    %335 = vdwg.mxu0
    %v336 = vrcp.pop %v286
    %v337 = vrcp.pop %v289
    %v338 = vmul.f32 %v330, %v336
    %v339 = vmul.f32 %v333, %v337
    %vm340 = vcmp.gt.f32.partialorder %v338, 0.0
    %vm341 = vcmp.gt.f32.partialorder %v339, 0.0
    %v342 = vmin.f32 %v338, 0.0
    %v343 = vmin.f32 %v339, 0.0
    %v344 = vmul.f32 %v342, 1.442695
    %v345 = vpow.pop %v344
    %v346 = vmul.f32 %v343, 1.442695
    %v347 = vpow.pop %v346
    %v348 = vsub.f32 %v345, 1.0
    %v349 = vsub.f32 %v347, 1.0
    %v350 = vsel %vm340, %v338, %v348
    %v351 = vsel %vm341, %v339, %v349
    %352 = vrot.lane.b32.xlu0 %v202, 125
    %v353 = vpop.permute.xlu0 %352
    %354 = vrot.lane.b32.xlu0 %v207, 125
    %v355 = vpop.permute.xlu0 %354
    %358 = vxpose.xlu0.b32.start [1/16] %v353, 128
    %359 = vxpose.xlu0.b32.cont [2/16] %v355, 128
    %360 = vxpose.xlu0.b32.cont [3/16] 0.0, 128
    %361 = vxpose.xlu0.b32.cont [4/16] 0.0, 128
    %362 = vxpose.xlu0.b32.cont [5/16] 0.0, 128
    %363 = vxpose.xlu0.b32.cont [6/16] 0.0, 128
    %364 = vxpose.xlu0.b32.cont [7/16] 0.0, 128
    %365 = vxpose.xlu0.b32.cont [8/16] 0.0, 128
    %366 = vxpose.xlu0.b32.cont [9/16] 0.0, 128
    %367 = vxpose.xlu0.b32.cont [10/16] 0.0, 128
    %368 = vxpose.xlu0.b32.cont [11/16] 0.0, 128
    %369 = vxpose.xlu0.b32.cont [12/16] 0.0, 128
    %370 = vxpose.xlu0.b32.cont [13/16] 0.0, 128
    %371 = vxpose.xlu0.b32.cont [14/16] 0.0, 128
    %372 = vxpose.xlu0.b32.cont [15/16] 0.0, 128
    %373 = vxpose.xlu0.b32.end [16/16] 0.0, 128
    %v374 = vpop.trf.xlu0
    %v375 = vpop.trf.xlu0
    %v376 = vpop.trf.xlu0
    %v377 = vpop.trf.xlu0
    %v378 = vpop.trf.xlu0
    %v379 = vpop.trf.xlu0
    %v380 = vpop.trf.xlu0
    %v381 = vpop.trf.xlu0
    %v382 = vpop.trf.xlu0
    %v383 = vpop.trf.xlu0
    %v384 = vpop.trf.xlu0
    %v385 = vpop.trf.xlu0
    %v386 = vpop.trf.xlu0
    %v387 = vpop.trf.xlu0
    %v388 = vpop.trf.xlu0
    %v389 = vpop.trf.xlu0
    %390 = vset.pattern.permute.xlu0 1
    %391 = vperm.xlu0 %390, %v202
    %v392 = vpop.permute.xlu0 %391
    %394 = vset.pattern.permute.xlu0 1
    %395 = vperm.xlu0 %394, %v207
    %v396 = vpop.permute.xlu0 %395
    %v398 = vlaneseq
    %v399 = vshrl.u32 %v398, 7
    %v400 = vsub.s32 0, %v399
    %v401 = vrot.slane %v374, %v400
    %v402 = vadd.f32 %v392, %v401
    %v403 = vadd.f32 %v396, %v401
    %vm404 = vcmp.gt.f32.partialorder %v402, 0.0
    %vm405 = vcmp.gt.f32.partialorder %v403, 0.0
    %v406 = vmul.f32 %v402, 0.2
    %v407 = vmul.f32 %v403, 0.2
    %v408 = vsel %vm404, %v402, %v406
    %v409 = vsel %vm405, %v403, %v407
    %v410 = vadd.f32 %v408, %v47
    %v411 = vadd.f32 %v409, %v48
    %v412 = vsel %vm51, %v410, -inf
    %413 = vmax.xlane.f32.xlu0 %v412
    %v414 = vpop.xlane.xlu0 %413
    %v415 = vsel %vm51, %v411, -inf
    %416 = vmax.xlane.f32.xlu0 %v415
    %v417 = vpop.xlane.xlu0 %416
    %v418 = vsub.f32 %v410, %v414
    %v419 = vsub.f32 %v411, %v417
    %v420 = vmul.f32 %v418, 1.442695
    %v421 = vpow.pop %v420
    %v422 = vmul.f32 %v419, 1.442695
    %v423 = vpow.pop %v422
    %v424 = vsel %vm51, %v421, 0.0
    %425 = vadd.xlane.f32.xlu0 %v424
    %v426 = vpop.xlane.xlu0 %425
    %v427 = vsel %vm51, %v423, 0.0
    %428 = vadd.xlane.f32.xlu0 %v427
    %v429 = vpop.xlane.xlu0 %428
    %v430 = vpack.c.bf16 %v423, %v421
    %432 = vrot.lane.b32.xlu0 %v291, 120
    %v433 = vpop.permute.xlu0 %432
    %v436 = vsel %vm51, %v430, 0
    %438 = vmatprep.subr.bf16.mxu0 0
    %439 = vmatpush1.bf16.msra.mxu0 %v433
    %440 = vmatprep.subr.bf16.mxu0 0
    %441 = vmatpush1.bf16.msra.mxu0 0
    %442 = vmatprep.subr.bf16.mxu0 0
    %443 = vmatpush1.bf16.msra.mxu0 0
    %444 = vmatprep.subr.bf16.mxu0 0
    %445 = vmatpush1.bf16.msra.mxu0 0
    %446 = vmatprep.subr.bf16.mxu0 0
    %447 = vmatpush1.bf16.msra.mxu0 0
    %448 = vmatprep.subr.bf16.mxu0 0
    %449 = vmatpush1.bf16.msra.mxu0 0
    %450 = vmatprep.subr.bf16.mxu0 0
    %451 = vmatpush1.bf16.msra.mxu0 0
    %452 = vmatprep.subr.bf16.mxu0 0
    %453 = vmatpush1.bf16.msra.mxu0 0
    %454 = vmatprep.subr.bf16.mxu0 0
    %455 = vmatpush1.bf16.msra.mxu0 0
    %456 = vmatprep.subr.bf16.mxu0 0
    %457 = vmatpush1.bf16.msra.mxu0 0
    %458 = vmatprep.subr.bf16.mxu0 0
    %459 = vmatpush1.bf16.msra.mxu0 0
    %460 = vmatprep.subr.bf16.mxu0 0
    %461 = vmatpush1.bf16.msra.mxu0 0
    %462 = vmatprep.subr.bf16.mxu0 0
    %463 = vmatpush1.bf16.msra.mxu0 0
    %464 = vmatprep.subr.bf16.mxu0 0
    %465 = vmatpush1.bf16.msra.mxu0 0
    %466 = vmatprep.subr.bf16.mxu0 0
    %467 = vmatpush1.bf16.msra.mxu0 0
    %468 = vmatprep.subr.bf16.mxu0 0
    %469 = vmatpush1.bf16.msra.mxu0 0
    %470 = vmatprep.mubr.bf16.mxu0 0
    %471 = vmatmul.mubr.bf16.gmra.mrb[0].mxu0 %v436
    %v472 = vpop.f32.mrb[0].mxu0
    %v473 = vadd.f32 0.0, %v472
    %v474 = vpop.f32.mrb[0].mxu0
    %v475 = vpop.f32.mrb[0].mxu0
    %v476 = vadd.f32 0.0, %v475
    %v477 = vpop.f32.mrb[0].mxu0
    %478 = vdwg.mxu0
    %v479 = vrcp.pop %v426
    %v480 = vrcp.pop %v429
    %v481 = vmul.f32 %v473, %v479
    %v482 = vmul.f32 %v476, %v480
    %vm483 = vcmp.gt.f32.partialorder %v481, 0.0
    %vm484 = vcmp.gt.f32.partialorder %v482, 0.0
    %v485 = vmin.f32 %v481, 0.0
    %v486 = vmin.f32 %v482, 0.0
    %v487 = vmul.f32 %v485, 1.442695
    %v488 = vpow.pop %v487
    %v489 = vmul.f32 %v486, 1.442695
    %v490 = vpow.pop %v489
    %v491 = vsub.f32 %v488, 1.0
    %v492 = vsub.f32 %v490, 1.0
    %v493 = vsel %vm483, %v481, %v491
    %v494 = vsel %vm484, %v482, %v492
    %497 = vrot.lane.b32.xlu0 %v493, 8
    %v498 = vpop.permute.xlu0 %497
    %499 = vrot.lane.b32.xlu0 %v494, 8
    %v500 = vpop.permute.xlu0 %499
    %vm503 = vcmask 64512
    %v504 = vsel %vm503, %v350, %v498
    %v505 = vsel %vm503, %v351, %v500
    %v506 = vld [vmem:[%s4] sm:$0xff]
    %v507 = vld [vmem:[%s4 + $0x8] sm:$0xff]
    %v509 = vsel %vm51, %v504, 0
    %v512 = vsel %vm51, %v505, 0
    %514 = vmatprep.subr.mxu0 0.0
    %515 = vmatpush1.msra.mxu0 %v506
    %516 = vmatprep.subr.mxu0 0.0
    %517 = vmatpush1.msra.mxu0 %v507
    %518 = vmatprep.subr.mxu0 0.0
    %519 = vmatpush1.msra.mxu0 0.0
    %520 = vmatprep.subr.mxu0 0.0
    %521 = vmatpush1.msra.mxu0 0.0
    %522 = vmatprep.subr.mxu0 0.0
    %523 = vmatpush1.msra.mxu0 0.0
    %524 = vmatprep.subr.mxu0 0.0
    %525 = vmatpush1.msra.mxu0 0.0
    %526 = vmatprep.subr.mxu0 0.0
    %527 = vmatpush1.msra.mxu0 0.0
    %528 = vmatprep.subr.mxu0 0.0
    %529 = vmatpush1.msra.mxu0 0.0
    %530 = vmatprep.subr.mxu0 0.0
    %531 = vmatpush1.msra.mxu0 0.0
    %532 = vmatprep.subr.mxu0 0.0
    %533 = vmatpush1.msra.mxu0 0.0
    %534 = vmatprep.subr.mxu0 0.0
    %535 = vmatpush1.msra.mxu0 0.0
    %536 = vmatprep.subr.mxu0 0.0
    %537 = vmatpush1.msra.mxu0 0.0
    %538 = vmatprep.subr.mxu0 0.0
    %539 = vmatpush1.msra.mxu0 0.0
    %540 = vmatprep.subr.mxu0 0.0
    %541 = vmatpush1.msra.mxu0 0.0
    %542 = vmatprep.subr.mxu0 0.0
    %543 = vmatpush1.msra.mxu0 0.0
    %544 = vmatprep.subr.mxu0 0.0
    %545 = vmatpush1.msra.mxu0 0.0
    %546 = vmatprep.subr.mxu0 0.0
    %547 = vmatpush1.msra.mxu0 0.0
    %548 = vmatprep.subr.mxu0 0.0
    %549 = vmatpush1.msra.mxu0 0.0
    %550 = vmatprep.subr.mxu0 0.0
    %551 = vmatpush1.msra.mxu0 0.0
    %552 = vmatprep.subr.mxu0 0.0
    %553 = vmatpush1.msra.mxu0 0.0
    %554 = vmatprep.subr.mxu0 0.0
    %555 = vmatpush1.msra.mxu0 0.0
    %556 = vmatprep.subr.mxu0 0.0
    %557 = vmatpush1.msra.mxu0 0.0
    %558 = vmatprep.subr.mxu0 0.0
    %559 = vmatpush1.msra.mxu0 0.0
    %560 = vmatprep.subr.mxu0 0.0
    %561 = vmatpush1.msra.mxu0 0.0
    %562 = vmatprep.subr.mxu0 0.0
    %563 = vmatpush1.msra.mxu0 0.0
    %564 = vmatprep.subr.mxu0 0.0
    %565 = vmatpush1.msra.mxu0 0.0
    %566 = vmatprep.subr.mxu0 0.0
    %567 = vmatpush1.msra.mxu0 0.0
    %568 = vmatprep.subr.mxu0 0.0
    %569 = vmatpush1.msra.mxu0 0.0
    %570 = vmatprep.subr.mxu0 0.0
    %571 = vmatpush1.msra.mxu0 0.0
    %572 = vmatprep.subr.mxu0 0.0
    %573 = vmatpush1.msra.mxu0 0.0
    %574 = vmatprep.subr.mxu0 0.0
    %575 = vmatpush1.msra.mxu0 0.0
    %576 = vmatprep.subr.mxu0 0.0
    %577 = vmatpush1.msra.mxu0 0.0
    %578 = vmatprep.mubr.f32.mxu0 0.0
    %579 = vmatmul.mubr.f32.gmra.mrb[0].mxu0 %v509
    %v580 = vpop.f32.mrb[0].mxu0
    %v581 = vadd.f32 0.0, %v580
    %v582 = vpop.f32.mrb[0].mxu0
    %583 = vmatprep.mubr.f32.mxu0 0.0
    %584 = vmatmul.mubr.f32.gmra.mrb[0].mxu0 %v512
    %v585 = vpop.f32.mrb[0].mxu0
    %v586 = vadd.f32 0.0, %v585
    %v587 = vpop.f32.mrb[0].mxu0
    %588 = vdwg.mxu0
    %v589 = vld [vmem:[%s5] sm:$0xff]
    %v590 = vld [vmem:[%s5 + $0x8] sm:$0xff]
    %591 = vmatprep.subr.mxu0 0.0
    %592 = vmatpush1.msra.mxu0 %v589
    %593 = vmatprep.subr.mxu0 0.0
    %594 = vmatpush1.msra.mxu0 %v590
    %595 = vmatprep.subr.mxu0 0.0
    %596 = vmatpush1.msra.mxu0 0.0
    %597 = vmatprep.subr.mxu0 0.0
    %598 = vmatpush1.msra.mxu0 0.0
    %599 = vmatprep.subr.mxu0 0.0
    %600 = vmatpush1.msra.mxu0 0.0
    %601 = vmatprep.subr.mxu0 0.0
    %602 = vmatpush1.msra.mxu0 0.0
    %603 = vmatprep.subr.mxu0 0.0
    %604 = vmatpush1.msra.mxu0 0.0
    %605 = vmatprep.subr.mxu0 0.0
    %606 = vmatpush1.msra.mxu0 0.0
    %607 = vmatprep.subr.mxu0 0.0
    %608 = vmatpush1.msra.mxu0 0.0
    %609 = vmatprep.subr.mxu0 0.0
    %610 = vmatpush1.msra.mxu0 0.0
    %611 = vmatprep.subr.mxu0 0.0
    %612 = vmatpush1.msra.mxu0 0.0
    %613 = vmatprep.subr.mxu0 0.0
    %614 = vmatpush1.msra.mxu0 0.0
    %615 = vmatprep.subr.mxu0 0.0
    %616 = vmatpush1.msra.mxu0 0.0
    %617 = vmatprep.subr.mxu0 0.0
    %618 = vmatpush1.msra.mxu0 0.0
    %619 = vmatprep.subr.mxu0 0.0
    %620 = vmatpush1.msra.mxu0 0.0
    %621 = vmatprep.subr.mxu0 0.0
    %622 = vmatpush1.msra.mxu0 0.0
    %623 = vmatprep.subr.mxu0 0.0
    %624 = vmatpush1.msra.mxu0 0.0
    %625 = vmatprep.subr.mxu0 0.0
    %626 = vmatpush1.msra.mxu0 0.0
    %627 = vmatprep.subr.mxu0 0.0
    %628 = vmatpush1.msra.mxu0 0.0
    %629 = vmatprep.subr.mxu0 0.0
    %630 = vmatpush1.msra.mxu0 0.0
    %631 = vmatprep.subr.mxu0 0.0
    %632 = vmatpush1.msra.mxu0 0.0
    %633 = vmatprep.subr.mxu0 0.0
    %634 = vmatpush1.msra.mxu0 0.0
    %635 = vmatprep.subr.mxu0 0.0
    %636 = vmatpush1.msra.mxu0 0.0
    %637 = vmatprep.subr.mxu0 0.0
    %638 = vmatpush1.msra.mxu0 0.0
    %639 = vmatprep.subr.mxu0 0.0
    %640 = vmatpush1.msra.mxu0 0.0
    %641 = vmatprep.subr.mxu0 0.0
    %642 = vmatpush1.msra.mxu0 0.0
    %643 = vmatprep.subr.mxu0 0.0
    %644 = vmatpush1.msra.mxu0 0.0
    %645 = vmatprep.subr.mxu0 0.0
    %646 = vmatpush1.msra.mxu0 0.0
    %647 = vmatprep.subr.mxu0 0.0
    %648 = vmatpush1.msra.mxu0 0.0
    %649 = vmatprep.subr.mxu0 0.0
    %650 = vmatpush1.msra.mxu0 0.0
    %651 = vmatprep.subr.mxu0 0.0
    %652 = vmatpush1.msra.mxu0 0.0
    %653 = vmatprep.subr.mxu0 0.0
    %654 = vmatpush1.msra.mxu0 0.0
    %655 = vmatprep.mubr.f32.mxu0 0.0
    %656 = vmatmul.mubr.f32.gmra.mrb[0].mxu0 %v509
    %v657 = vpop.f32.mrb[0].mxu0
    %v658 = vadd.f32 0.0, %v657
    %v659 = vpop.f32.mrb[0].mxu0
    %660 = vmatprep.mubr.f32.mxu0 0.0
    %661 = vmatmul.mubr.f32.gmra.mrb[0].mxu0 %v512
    %v662 = vpop.f32.mrb[0].mxu0
    %v663 = vadd.f32 0.0, %v662
    %v664 = vpop.f32.mrb[0].mxu0
    %665 = vdwg.mxu0
    %668 = vrot.lane.b32.xlu0 %v658, 127
    %v669 = vpop.permute.xlu0 %668
    %670 = vrot.lane.b32.xlu0 %v663, 127
    %v671 = vpop.permute.xlu0 %670
    %674 = vxpose.xlu0.b32.start [1/16] %v669, 128
    %675 = vxpose.xlu0.b32.cont [2/16] %v671, 128
    %676 = vxpose.xlu0.b32.cont [3/16] 0.0, 128
    %677 = vxpose.xlu0.b32.cont [4/16] 0.0, 128
    %678 = vxpose.xlu0.b32.cont [5/16] 0.0, 128
    %679 = vxpose.xlu0.b32.cont [6/16] 0.0, 128
    %680 = vxpose.xlu0.b32.cont [7/16] 0.0, 128
    %681 = vxpose.xlu0.b32.cont [8/16] 0.0, 128
    %682 = vxpose.xlu0.b32.cont [9/16] 0.0, 128
    %683 = vxpose.xlu0.b32.cont [10/16] 0.0, 128
    %684 = vxpose.xlu0.b32.cont [11/16] 0.0, 128
    %685 = vxpose.xlu0.b32.cont [12/16] 0.0, 128
    %686 = vxpose.xlu0.b32.cont [13/16] 0.0, 128
    %687 = vxpose.xlu0.b32.cont [14/16] 0.0, 128
    %688 = vxpose.xlu0.b32.cont [15/16] 0.0, 128
    %689 = vxpose.xlu0.b32.end [16/16] 0.0, 128
    %v690 = vpop.trf.xlu0
    %v691 = vpop.trf.xlu0
    %v692 = vpop.trf.xlu0
    %v693 = vpop.trf.xlu0
    %v694 = vpop.trf.xlu0
    %v695 = vpop.trf.xlu0
    %v696 = vpop.trf.xlu0
    %v697 = vpop.trf.xlu0
    %v698 = vpop.trf.xlu0
    %v699 = vpop.trf.xlu0
    %v700 = vpop.trf.xlu0
    %v701 = vpop.trf.xlu0
    %v702 = vpop.trf.xlu0
    %v703 = vpop.trf.xlu0
    %v704 = vpop.trf.xlu0
    %v705 = vpop.trf.xlu0
    %706 = vset.pattern.permute.xlu0 0
    %707 = vperm.xlu0 %706, %v658
    %v708 = vpop.permute.xlu0 %707
    %710 = vset.pattern.permute.xlu0 0
    %711 = vperm.xlu0 %710, %v663
    %v712 = vpop.permute.xlu0 %711
    %v714 = vlaneseq
    %v715 = vshrl.u32 %v714, 7
    %v716 = vsub.s32 0, %v715
    %v717 = vrot.slane %v690, %v716
    %v718 = vadd.f32 %v708, %v717
    %v719 = vadd.f32 %v712, %v717
    %vm720 = vcmp.gt.f32.partialorder %v718, 0.0
    %vm721 = vcmp.gt.f32.partialorder %v719, 0.0
    %v722 = vmul.f32 %v718, 0.2
    %v723 = vmul.f32 %v719, 0.2
    %v724 = vsel %vm720, %v718, %v722
    %v725 = vsel %vm721, %v719, %v723
    %v726 = vadd.f32 %v724, %v47
    %v727 = vadd.f32 %v725, %v48
    %v728 = vsel %vm51, %v726, -inf
    %729 = vmax.xlane.f32.xlu0 %v728
    %v730 = vpop.xlane.xlu0 %729
    %v731 = vsel %vm51, %v727, -inf
    %732 = vmax.xlane.f32.xlu0 %v731
    %v733 = vpop.xlane.xlu0 %732
    %v734 = vsub.f32 %v726, %v730
    %v735 = vsub.f32 %v727, %v733
    %v736 = vmul.f32 %v734, 1.442695
    %v737 = vpow.pop %v736
    %v738 = vmul.f32 %v735, 1.442695
    %v739 = vpow.pop %v738
    %v740 = vsel %vm51, %v737, 0.0
    %741 = vadd.xlane.f32.xlu0 %v740
    %v742 = vpop.xlane.xlu0 %741
    %v743 = vsel %vm51, %v739, 0.0
    %744 = vadd.xlane.f32.xlu0 %v743
    %v745 = vpop.xlane.xlu0 %744
    %v746 = vpack.c.bf16 %v739, %v737
    %v747 = vpack.c.bf16 %v586, %v581
    %v749 = vsel %vm51, %v746, 0
    %751 = vmatprep.subr.bf16.mxu0 0
    %752 = vmatpush1.bf16.msra.mxu0 %v747
    %753 = vmatprep.subr.bf16.mxu0 0
    %754 = vmatpush1.bf16.msra.mxu0 0
    %755 = vmatprep.subr.bf16.mxu0 0
    %756 = vmatpush1.bf16.msra.mxu0 0
    %757 = vmatprep.subr.bf16.mxu0 0
    %758 = vmatpush1.bf16.msra.mxu0 0
    %759 = vmatprep.subr.bf16.mxu0 0
    %760 = vmatpush1.bf16.msra.mxu0 0
    %761 = vmatprep.subr.bf16.mxu0 0
    %762 = vmatpush1.bf16.msra.mxu0 0
    %763 = vmatprep.subr.bf16.mxu0 0
    %764 = vmatpush1.bf16.msra.mxu0 0
    %765 = vmatprep.subr.bf16.mxu0 0
    %766 = vmatpush1.bf16.msra.mxu0 0
    %767 = vmatprep.subr.bf16.mxu0 0
    %768 = vmatpush1.bf16.msra.mxu0 0
    %769 = vmatprep.subr.bf16.mxu0 0
    %770 = vmatpush1.bf16.msra.mxu0 0
    %771 = vmatprep.subr.bf16.mxu0 0
    %772 = vmatpush1.bf16.msra.mxu0 0
    %773 = vmatprep.subr.bf16.mxu0 0
    %774 = vmatpush1.bf16.msra.mxu0 0
    %775 = vmatprep.subr.bf16.mxu0 0
    %776 = vmatpush1.bf16.msra.mxu0 0
    %777 = vmatprep.subr.bf16.mxu0 0
    %778 = vmatpush1.bf16.msra.mxu0 0
    %779 = vmatprep.subr.bf16.mxu0 0
    %780 = vmatpush1.bf16.msra.mxu0 0
    %781 = vmatprep.subr.bf16.mxu0 0
    %782 = vmatpush1.bf16.msra.mxu0 0
    %783 = vmatprep.mubr.bf16.mxu0 0
    %784 = vmatmul.mubr.bf16.gmra.mrb[0].mxu0 %v749
    %v785 = vpop.f32.mrb[0].mxu0
    %v786 = vadd.f32 0.0, %v785
    %v787 = vpop.f32.mrb[0].mxu0
    %v788 = vpop.f32.mrb[0].mxu0
    %v789 = vadd.f32 0.0, %v788
    %v790 = vpop.f32.mrb[0].mxu0
    %791 = vdwg.mxu0
    %v792 = vrcp.pop %v742
    %v793 = vrcp.pop %v745
    %v794 = vmul.f32 %v786, %v792
    %v795 = vmul.f32 %v789, %v793
    %vm796 = vcmp.gt.f32.partialorder %v794, 0.0
    %vm797 = vcmp.gt.f32.partialorder %v795, 0.0
    %v798 = vmin.f32 %v794, 0.0
    %v799 = vmin.f32 %v795, 0.0
    %v800 = vmul.f32 %v798, 1.442695
    %v801 = vpow.pop %v800
    %v802 = vmul.f32 %v799, 1.442695
    %v803 = vpow.pop %v802
    %v804 = vsub.f32 %v801, 1.0
    %v805 = vsub.f32 %v803, 1.0
    %v806 = vsel %vm796, %v794, %v804
    %v807 = vsel %vm797, %v795, %v805
    %v808 = vlaneseq
    %v809 = vand.u32 %v808, 127
    %vm810 = vcmp.lt.s32.totalorder %v809, 4
    %v811 = vsel %vm810, %v806, 0.0
    %v812 = vsel %vm810, %v807, 0.0
    %813 = vadd.xlane.f32.xlu0 %v811
    %v814 = vpop.xlane.xlu0 %813
    %815 = vadd.xlane.f32.xlu0 %v812
    %v816 = vpop.xlane.xlu0 %815
    %v817 = vmul.f32 %v814, 0.25
    %v818 = vmul.f32 %v816, 0.25
    %v819 = vsub.f32 %v806, %v817
    %v820 = vsub.f32 %v807, %v818
    %v821 = vmul.f32 %v819, %v819
    %v822 = vmul.f32 %v820, %v820
    %v823 = vsel %vm810, %v821, 0.0
    %v824 = vsel %vm810, %v822, 0.0
    %825 = vadd.xlane.f32.xlu0 %v823
    %v826 = vpop.xlane.xlu0 %825
    %827 = vadd.xlane.f32.xlu0 %v824
    %v828 = vpop.xlane.xlu0 %827
    %v829 = vmul.f32 %v826, 0.25
    %v830 = vmul.f32 %v828, 0.25
    %v831 = vadd.f32 %v829, 1e-05
    %v832 = vadd.f32 %v830, 1e-05
    %v833 = vrsqrt.pop %v831
    %v834 = vrsqrt.pop %v832
    %v835 = vmul.f32 %v819, %v833
    %v836 = vmul.f32 %v820, %v834
    %v837 = vld [vmem:[%s7] sm:$0x1]
    %v838 = vld [vmem:[%s6] sm:$0x1]
    %v840 = vlaneseq
    %v841 = vshrl.u32 %v840, 7
    %v842 = vsub.s32 0, %v841
    %v843 = vrot.slane %v838, %v842
    %v845 = vmul.f32 %v835, %v843
    %v846 = vmul.f32 %v836, %v843
    %v848 = vlaneseq
    %v849 = vshrl.u32 %v848, 7
    %v850 = vsub.s32 0, %v849
    %v851 = vrot.slane %v837, %v850
    %v853 = vadd.f32 %v851, %v845
    %v854 = vadd.f32 %v851, %v846
    %v855 = vsel %vm810, %v853, -1e+30
    %v856 = vsel %vm810, %v854, -1e+30
    %857 = vmax.xlane.f32.xlu0 %v855
    %v858 = vpop.xlane.xlu0 %857
    %859 = vmax.xlane.f32.xlu0 %v856
    %v860 = vpop.xlane.xlu0 %859
    %v861 = vsub.f32 %v853, %v858
    %v862 = vsub.f32 %v854, %v860
    %v863 = vmul.f32 %v861, 1.442695
    %v864 = vpow.pop %v863
    %v865 = vmul.f32 %v862, 1.442695
    %v866 = vpow.pop %v865
    %v867 = vsel %vm810, %v864, 0.0
    %v868 = vsel %vm810, %v866, 0.0
    %869 = vadd.xlane.f32.xlu0 %v867
    %v870 = vpop.xlane.xlu0 %869
    %871 = vadd.xlane.f32.xlu0 %v868
    %v872 = vpop.xlane.xlu0 %871
    %v873 = vlog2.pop %v870
    %v874 = vmul.f32 %v873, 0.6931472
    %v875 = vlog2.pop %v872
    %v876 = vmul.f32 %v875, 0.6931472
    %v877 = vsub.f32 %v861, %v874
    %v878 = vsub.f32 %v862, %v876
    %v879 = vsel %vm810, %v877, 0.0
    %v880 = vsel %vm810, %v878, 0.0
    %881 = vst [vmem:[#allocation5] sm:$0xff] %v879
    %882 = vst [vmem:[#allocation5 + $0x8] sm:$0xff] %v880
    // Predicated region
    $region38: #{tpu_custom_call.1} parent=1 // pred_check
      _
    $region39: #{tpu_custom_call.1} parent=1 // pred_check_branch
      %884 = sbr.rel (0) target = $region41
    $region40: #{tpu_custom_call.1} parent=1 // pred_region
      %s886 = ssub.s32 256, 256
      %887 = vsyncadd [#allocation4], %s886
      %s888 = sshll.u32 [#allocation5], 4
      %s889 = int_to_ptr.vmem [resolvable:$true] %s888
      %894 = dma.vmem_to_hbm [thread:$0]  %s889, 256, %s8, [#allocation4], 128, 128, 8
    $region41: #{tpu_custom_call.1} parent=1 // pred_fallthru
      _
    // Predicated region
    $region42: #{tpu_custom_call.1} parent=1 // pred_check
      _
    $region43: #{tpu_custom_call.1} parent=1 // pred_check_branch
      %896 = sbr.rel (0) target = $region45
    $region44: #{tpu_custom_call.1} parent=1 // pred_region
      %897 = dma.done [#allocation4], 256
    $region45: #{tpu_custom_call.1} parent=1 // pred_fallthru
      _
    %898 = vsyncpa [#allocation3], 1
    %899 = vsyncpa [#allocation4], 1

</llo_original>
